<compile_context>
chip_gen: v5e
topology: v5e:2x2
jax: 0.10.0
libtpu: 0.0.40
codegen_flags: <defaults>
</compile_context>

<pallas_src>
import functools

import jax
import jax.numpy as jnp
from jax.experimental import pallas as pl
from jax.experimental.pallas import tpu as pltpu


def _round_up(x, m):
    return (x + m - 1) // m * m


def ffn_kernel(x_ref, w1_ref, b1_ref, w2_ref, b2_ref, g_ref, beta_ref,
               o_ref, acc_ref):
    # grid = (row tiles, d_ff tiles); the d_ff axis (reduction of the 2nd matmul) is last.
    k = pl.program_id(1)

    @pl.when(k == 0)
    def _init():
        acc_ref[...] = jnp.zeros_like(acc_ref)

    # conv1 (1x1) block: (tile_m, d_model) @ (d_model, tile_ff), f32 accumulation on MXU.
    h = jnp.dot(x_ref[...], w1_ref[...], preferred_element_type=jnp.float32)
    h = jnp.maximum(h + b1_ref[...], 0.0)

    # conv2 (1x1) block, accumulated into f32 scratch across the d_ff axis.
    acc_ref[...] += jnp.dot(h.astype(w2_ref.dtype), w2_ref[...],
                            preferred_element_type=jnp.float32)

    @pl.when(k == pl.num_programs(1) - 1)
    def _finalize():
        # residual + LayerNorm over the feature (last) axis, all in f32.
        z = acc_ref[...] + b2_ref[...] + x_ref[...].astype(jnp.float32)
        mean = jnp.mean(z, axis=-1, keepdims=True)
        var = jnp.mean((z - mean) ** 2, axis=-1, keepdims=True)
        zn = (z - mean) * jax.lax.rsqrt(var + 1e-5)
        o_ref[...] = (zn * g_ref[...] + beta_ref[...]).astype(o_ref.dtype)


@functools.partial(jax.jit, static_argnames=("tile_m", "tile_ff"))
def position_wise_ffn(x, w1, b1, w2, b2, gamma, beta, *, tile_m=512, tile_ff=1024):
    """x: [B, S, d_model] -> [B, S, d_model]. Matmuls run in x.dtype, epilogue in f32."""
    B, S, d_model = x.shape
    d_ff = w1.shape[1]
    M = B * S

    # Matmul operands in the input dtype (bf16 -> bf16 MXU path); LN params stay f32.
    w1 = w1.astype(x.dtype)
    w2 = w2.astype(x.dtype)
    b1 = b1.astype(jnp.float32)
    b2 = b2.astype(jnp.float32)
    gamma = gamma.astype(jnp.float32)
    beta = beta.astype(jnp.float32)

    # ---- tiling / padding (no divisibility asserts) -------------------------------
    tile_m = min(tile_m, _round_up(M, 8))            # multiple of 8 sublanes
    m_pad = _round_up(M, tile_m)
    tile_ff = min(tile_ff, _round_up(d_ff, 128))     # multiple of 128 lanes
    ff_pad = _round_up(d_ff, tile_ff)

    x2d = x.reshape(M, d_model)
    if m_pad != M:
        x2d = jnp.pad(x2d, ((0, m_pad - M), (0, 0)))
    if ff_pad != d_ff:
        # Zero-padding the hidden dim is exact: padded W2 rows are zero.
        w1 = jnp.pad(w1, ((0, 0), (0, ff_pad - d_ff)))
        b1 = jnp.pad(b1, ((0, ff_pad - d_ff),))
        w2 = jnp.pad(w2, ((0, ff_pad - d_ff), (0, 0)))

    b1_2d = b1.reshape(1, ff_pad)
    b2_2d = b2.reshape(1, d_model)
    g_2d = gamma.reshape(1, d_model)
    beta_2d = beta.reshape(1, d_model)

    grid = (m_pad // tile_m, ff_pad // tile_ff)

    # ---- VMEM budget (double-buffered streamed blocks + resident scratch) ---------
    itm = jnp.dtype(x.dtype).itemsize
    vmem_est = (
        2 * tile_m * d_model * itm          # x tile
        + 2 * tile_m * d_model * itm        # out tile
        + 2 * d_model * tile_ff * itm       # W1 block (streamed over d_ff)
        + 2 * tile_ff * d_model * itm       # W2 block (streamed over d_ff)
        + 2 * (tile_ff + 3 * d_model) * 4   # b1 block, b2, gamma, beta
        + tile_m * d_model * 4              # f32 accumulator scratch
        + 2 * tile_m * tile_ff * 4          # f32 hidden-activation headroom
    )
    # Raise the scoped-VMEM limit above the 16/32 MiB defaults, but stay within
    # v7x's 64 MiB physical VMEM.
    vmem_limit = int(min(max(2 * vmem_est, 32 * 1024 * 1024), 64 * 1024 * 1024))

    cost = pl.CostEstimate(
        flops=4 * M * d_model * d_ff,
        transcendentals=M,
        bytes_accessed=int(2 * M * d_model * itm
                           + 2 * d_model * d_ff * itm
                           + (d_ff + 3 * d_model) * 4),
    )

    out = pl.pallas_call(
        ffn_kernel,
        out_shape=jax.ShapeDtypeStruct((m_pad, d_model), x.dtype),
        grid_spec=pltpu.PrefetchScalarGridSpec(
            num_scalar_prefetch=0,
            grid=grid,
            in_specs=[
                pl.BlockSpec((tile_m, d_model), lambda i, k: (i, 0)),   # x rows
                pl.BlockSpec((d_model, tile_ff), lambda i, k: (0, k)),  # W1 (streamed)
                pl.BlockSpec((1, tile_ff), lambda i, k: (0, k)),        # b1 (streamed)
                pl.BlockSpec((tile_ff, d_model), lambda i, k: (k, 0)),  # W2 (streamed)
                pl.BlockSpec((1, d_model), lambda i, k: (0, 0)),        # b2
                pl.BlockSpec((1, d_model), lambda i, k: (0, 0)),        # gamma
                pl.BlockSpec((1, d_model), lambda i, k: (0, 0)),        # beta
            ],
            out_specs=pl.BlockSpec((tile_m, d_model), lambda i, k: (i, 0)),
            scratch_shapes=[pltpu.VMEM((tile_m, d_model), jnp.float32)],
        ),
        compiler_params=pltpu.CompilerParams(
            dimension_semantics=("parallel", "arbitrary"),
            vmem_limit_bytes=vmem_limit,
        ),
        cost_estimate=cost,
    )(x2d, w1, b1_2d, w2, b2_2d, g_2d, beta_2d)

    return out[:M].reshape(B, S, d_model)


def reference_ffn(x, w1, b1, w2, b2, gamma, beta):
    x = x.astype(jnp.float32)
    h = jnp.einsum("bsd,df->bsf", x, w1.astype(jnp.float32), precision="highest") + b1
    h = jnp.maximum(h, 0.0)
    y = jnp.einsum("bsf,fd->bsd", h, w2.astype(jnp.float32), precision="highest") + b2
    z = y + x
    mean = jnp.mean(z, axis=-1, keepdims=True)
    var = jnp.mean((z - mean) ** 2, axis=-1, keepdims=True)
    return (z - mean) / jnp.sqrt(var + 1e-5) * gamma + beta


if __name__ == "__main__":
    # Small, lane-dense demo shapes (feature dims are multiples of 128).
    B, S = 2, 8
    d_model, d_ff = 128, 512

    key = jax.random.PRNGKey(0)
    kx, k1, kb1, k2, kb2 = jax.random.split(key, 5)

    x = jax.random.normal(kx, (B, S, d_model), dtype=jnp.float32)

    # Conv1d(k=1) weights (PyTorch shape (out, in, 1)) stored transposed as (in, out).
    w1 = 0.05 * jax.random.normal(k1, (d_model, d_ff), dtype=jnp.float32)
    b1 = 0.05 * jax.random.normal(kb1, (d_ff,), dtype=jnp.float32)
    w2 = 0.05 * jax.random.normal(k2, (d_ff, d_model), dtype=jnp.float32)
    b2 = 0.05 * jax.random.normal(kb2, (d_model,), dtype=jnp.float32)

    # LayerNorm default init: weight=1, bias=0
    gamma = jnp.ones((d_model,), dtype=jnp.float32)
    beta = jnp.zeros((d_model,), dtype=jnp.float32)

    # f32 path (matches the PyTorch module bit-for-bit semantics)
    out = jax.block_until_ready(position_wise_ffn(x, w1, b1, w2, b2, gamma, beta))
    ref = reference_ffn(x, w1, b1, w2, b2, gamma, beta)
    assert out.shape == (B, S, d_model)
    assert jnp.allclose(out, ref, atol=2e-3, rtol=2e-3), "f32 mismatch vs reference"

    # bf16 path (matmuls on the bf16 MXU, f32 accumulation + f32 LayerNorm epilogue)
    xb = x.astype(jnp.bfloat16)
    out_bf16 = jax.block_until_ready(position_wise_ffn(xb, w1, b1, w2, b2, gamma, beta))
    ref_bf16 = reference_ffn(xb, w1.astype(jnp.bfloat16), b1,
                             w2.astype(jnp.bfloat16), b2, gamma, beta)
    assert out_bf16.shape == (B, S, d_model)
    assert jnp.allclose(out_bf16.astype(jnp.float32), ref_bf16,
                        atol=5e-2, rtol=5e-2), "bf16 mismatch vs reference"

    print("KERNEL_OK")
</pallas_src>

<mosaic_0001>
module attributes {stable_mosaic.version = 11 : i64} {
  func.func @ffn_kernel(%arg0: i32, %arg1: i32, %arg2: memref<16x128xf32, #tpu.memory_space<vmem>>, %arg3: memref<128x512xf32, #tpu.memory_space<vmem>>, %arg4: memref<1x512xf32, #tpu.memory_space<vmem>>, %arg5: memref<512x128xf32, #tpu.memory_space<vmem>>, %arg6: memref<1x128xf32, #tpu.memory_space<vmem>>, %arg7: memref<1x128xf32, #tpu.memory_space<vmem>>, %arg8: memref<1x128xf32, #tpu.memory_space<vmem>>, %arg9: memref<16x128xf32, #tpu.memory_space<vmem>>, %arg10: memref<16x128xf32, #tpu.memory_space<vmem>>) attributes {dimension_semantics = [#tpu.dimension_semantics<parallel>, #tpu.dimension_semantics<arbitrary>], iteration_bounds = array<i64: 1, 1>, scalar_prefetch = 0 : i64, scratch_operands = 1 : i64, tpu.core_type = #tpu.core_type<tc>, window_params = [{transform_indices = @transform_0, window_bounds = array<i64: 16, 128>}, {transform_indices = @transform_1, window_bounds = array<i64: 128, 512>}, {transform_indices = @transform_2, window_bounds = array<i64: 1, 512>}, {transform_indices = @transform_3, window_bounds = array<i64: 512, 128>}, {pipeline_mode = #tpu.pipeline_mode<synchronous>, transform_indices = @transform_4, window_bounds = array<i64: 1, 128>}, {pipeline_mode = #tpu.pipeline_mode<synchronous>, transform_indices = @transform_5, window_bounds = array<i64: 1, 128>}, {pipeline_mode = #tpu.pipeline_mode<synchronous>, transform_indices = @transform_6, window_bounds = array<i64: 1, 128>}, {transform_indices = @transform_7, window_bounds = array<i64: 16, 128>}]} {
    %c0_i32 = arith.constant 0 : i32
    %0 = arith.cmpi eq, %arg1, %c0_i32 : i32
    %1 = arith.extui %0 : i1 to i32
    %c0_i32_0 = arith.constant 0 : i32
    %2 = arith.cmpi ne, %1, %c0_i32_0 : i32
    scf.if %2 {
      %cst_16 = arith.constant 0.000000e+00 : f32
      %19 = vector.broadcast %cst_16 : f32 to vector<16x128xf32>
      %c0_17 = arith.constant 0 : index
      %c0_18 = arith.constant 0 : index
      %20 = vector.load %arg10[%c0_17, %c0_18] : memref<16x128xf32, #tpu.memory_space<vmem>>, vector<16x128xf32>
      tpu.vector_store %arg10[%c0_17, %c0_18], %19 {strides = array<i32>} : memref<16x128xf32, #tpu.memory_space<vmem>>, vector<16x128xf32>,
    } else {
    }
    %c0 = arith.constant 0 : index
    %c0_1 = arith.constant 0 : index
    %3 = vector.load %arg2[%c0, %c0_1] : memref<16x128xf32, #tpu.memory_space<vmem>>, vector<16x128xf32>
    %c0_2 = arith.constant 0 : index
    %c0_3 = arith.constant 0 : index
    %4 = vector.load %arg3[%c0_2, %c0_3] : memref<128x512xf32, #tpu.memory_space<vmem>>, vector<128x512xf32>
    %cst = arith.constant dense<0.000000e+00> : vector<16x512xf32>
    %5 = tpu.matmul %3, %4, %cst {dimension_numbers = #tpu.dot_dimension_numbers<[1], [0], [0], [1], [0, 0, 1, 1], [], []>} : vector<16x128xf32>, vector<128x512xf32>, vector<16x512xf32> -> vector<16x512xf32>
    %c0_4 = arith.constant 0 : index
    %c0_5 = arith.constant 0 : index
    %6 = vector.load %arg4[%c0_4, %c0_5] : memref<1x512xf32, #tpu.memory_space<vmem>>, vector<1x512xf32>
    %7 = vector.broadcast %6 : vector<1x512xf32> to vector<16x512xf32>
    %8 = arith.addf %5, %7 : vector<16x512xf32>
    %cst_6 = arith.constant 0.000000e+00 : f32
    %9 = vector.broadcast %cst_6 : f32 to vector<16x512xf32>
    %10 = arith.maximumf %8, %9 : vector<16x512xf32>
    %c0_7 = arith.constant 0 : index
    %c0_8 = arith.constant 0 : index
    %11 = vector.load %arg10[%c0_7, %c0_8] : memref<16x128xf32, #tpu.memory_space<vmem>>, vector<16x128xf32>
    %c0_9 = arith.constant 0 : index
    %c0_10 = arith.constant 0 : index
    %12 = vector.load %arg5[%c0_9, %c0_10] : memref<512x128xf32, #tpu.memory_space<vmem>>, vector<512x128xf32>
    %cst_11 = arith.constant dense<0.000000e+00> : vector<16x128xf32>
    %13 = tpu.matmul %10, %12, %cst_11 {dimension_numbers = #tpu.dot_dimension_numbers<[1], [0], [0], [1], [0, 0, 1, 1], [], []>} : vector<16x512xf32>, vector<512x128xf32>, vector<16x128xf32> -> vector<16x128xf32>
    %14 = arith.addf %11, %13 : vector<16x128xf32>
    %c0_12 = arith.constant 0 : index
    %c0_13 = arith.constant 0 : index
    %15 = vector.load %arg10[%c0_12, %c0_13] : memref<16x128xf32, #tpu.memory_space<vmem>>, vector<16x128xf32>
    tpu.vector_store %arg10[%c0_12, %c0_13], %14 {strides = array<i32>} : memref<16x128xf32, #tpu.memory_space<vmem>>, vector<16x128xf32>,
    %c0_i32_14 = arith.constant 0 : i32
    %16 = arith.cmpi eq, %arg1, %c0_i32_14 : i32
    %17 = arith.extui %16 : i1 to i32
    %c0_i32_15 = arith.constant 0 : i32
    %18 = arith.cmpi ne, %17, %c0_i32_15 : i32
    scf.if %18 {
      %c0_16 = arith.constant 0 : index
      %c0_17 = arith.constant 0 : index
      %19 = vector.load %arg10[%c0_16, %c0_17] : memref<16x128xf32, #tpu.memory_space<vmem>>, vector<16x128xf32>
      %c0_18 = arith.constant 0 : index
      %c0_19 = arith.constant 0 : index
      %20 = vector.load %arg6[%c0_18, %c0_19] : memref<1x128xf32, #tpu.memory_space<vmem>>, vector<1x128xf32>
      %21 = vector.broadcast %20 : vector<1x128xf32> to vector<16x128xf32>
      %22 = arith.addf %19, %21 : vector<16x128xf32>
      %c0_20 = arith.constant 0 : index
      %c0_21 = arith.constant 0 : index
      %23 = vector.load %arg2[%c0_20, %c0_21] : memref<16x128xf32, #tpu.memory_space<vmem>>, vector<16x128xf32>
      %24 = arith.addf %22, %23 : vector<16x128xf32>
      %cst_22 = arith.constant dense<0.000000e+00> : vector<16xf32>
      %25 = vector.multi_reduction <add>, %24, %cst_22 [1] : vector<16x128xf32> to vector<16xf32>
      %26 = vector.shape_cast %25 : vector<16xf32> to vector<16x1xf32>
      %cst_23 = arith.constant 1.280000e+02 : f32
      %27 = vector.broadcast %cst_23 : f32 to vector<16x1xf32>
      %28 = arith.divf %26, %27 : vector<16x1xf32>
      %29 = vector.broadcast %28 : vector<16x1xf32> to vector<16x128xf32>
      %30 = arith.subf %24, %29 : vector<16x128xf32>
      %31 = arith.mulf %30, %30 : vector<16x128xf32>
      %cst_24 = arith.constant dense<0.000000e+00> : vector<16xf32>
      %32 = vector.multi_reduction <add>, %31, %cst_24 [1] : vector<16x128xf32> to vector<16xf32>
      %33 = vector.shape_cast %32 : vector<16xf32> to vector<16x1xf32>
      %cst_25 = arith.constant 1.280000e+02 : f32
      %34 = vector.broadcast %cst_25 : f32 to vector<16x1xf32>
      %35 = arith.divf %33, %34 : vector<16x1xf32>
      %36 = vector.broadcast %28 : vector<16x1xf32> to vector<16x128xf32>
      %37 = arith.subf %24, %36 : vector<16x128xf32>
      %cst_26 = arith.constant 9.99999974E-6 : f32
      %38 = vector.broadcast %cst_26 : f32 to vector<16x1xf32>
      %39 = arith.addf %35, %38 : vector<16x1xf32>
      %40 = math.rsqrt %39 : vector<16x1xf32>
      %41 = vector.broadcast %40 : vector<16x1xf32> to vector<16x128xf32>
      %42 = arith.mulf %37, %41 : vector<16x128xf32>
      %c0_27 = arith.constant 0 : index
      %c0_28 = arith.constant 0 : index
      %43 = vector.load %arg7[%c0_27, %c0_28] : memref<1x128xf32, #tpu.memory_space<vmem>>, vector<1x128xf32>
      %44 = vector.broadcast %43 : vector<1x128xf32> to vector<16x128xf32>
      %45 = arith.mulf %42, %44 : vector<16x128xf32>
      %c0_29 = arith.constant 0 : index
      %c0_30 = arith.constant 0 : index
      %46 = vector.load %arg8[%c0_29, %c0_30] : memref<1x128xf32, #tpu.memory_space<vmem>>, vector<1x128xf32>
      %47 = vector.broadcast %46 : vector<1x128xf32> to vector<16x128xf32>
      %48 = arith.addf %45, %47 : vector<16x128xf32>
      %c0_31 = arith.constant 0 : index
      %c0_32 = arith.constant 0 : index
      %49 = vector.load %arg9[%c0_31, %c0_32] : memref<16x128xf32, #tpu.memory_space<vmem>>, vector<16x128xf32>
      tpu.vector_store %arg9[%c0_31, %c0_32], %48 {strides = array<i32>} : memref<16x128xf32, #tpu.memory_space<vmem>>, vector<16x128xf32>,
    } else {
    }
    return
  }
  func.func @transform_0(%arg0: i32, %arg1: i32) -> (i32, i32) {
    %c0_i32 = arith.constant 0 : i32
    %c0_i32_0 = arith.constant 0 : i32
    return %arg0, %c0_i32 : i32, i32
  }
  func.func @transform_1(%arg0: i32, %arg1: i32) -> (i32, i32) {
    %c0_i32 = arith.constant 0 : i32
    %c0_i32_0 = arith.constant 0 : i32
    return %c0_i32, %arg1 : i32, i32
  }
  func.func @transform_2(%arg0: i32, %arg1: i32) -> (i32, i32) {
    %c0_i32 = arith.constant 0 : i32
    %c0_i32_0 = arith.constant 0 : i32
    return %c0_i32, %arg1 : i32, i32
  }
  func.func @transform_3(%arg0: i32, %arg1: i32) -> (i32, i32) {
    %c0_i32 = arith.constant 0 : i32
    %c0_i32_0 = arith.constant 0 : i32
    return %arg1, %c0_i32 : i32, i32
  }
  func.func @transform_4(%arg0: i32, %arg1: i32) -> (i32, i32) {
    %c0_i32 = arith.constant 0 : i32
    %c0_i32_0 = arith.constant 0 : i32
    %c0_i32_1 = arith.constant 0 : i32
    return %c0_i32, %c0_i32_0 : i32, i32
  }
  func.func @transform_5(%arg0: i32, %arg1: i32) -> (i32, i32) {
    %c0_i32 = arith.constant 0 : i32
    %c0_i32_0 = arith.constant 0 : i32
    %c0_i32_1 = arith.constant 0 : i32
    return %c0_i32, %c0_i32_0 : i32, i32
  }
  func.func @transform_6(%arg0: i32, %arg1: i32) -> (i32, i32) {
    %c0_i32 = arith.constant 0 : i32
    %c0_i32_0 = arith.constant 0 : i32
    %c0_i32_1 = arith.constant 0 : i32
    return %c0_i32, %c0_i32_0 : i32, i32
  }
  func.func @transform_7(%arg0: i32, %arg1: i32) -> (i32, i32) {
    %c0_i32 = arith.constant 0 : i32
    %c0_i32_0 = arith.constant 0 : i32
    return %arg0, %c0_i32 : i32, i32
  }
}

</mosaic_0001>

<llo_original>
// kernel: position_wise_ffn.1
$region0: #{position_wise_ffn.1}
  #allocation0 [shape = 'u32[]', space=smem, size = 0x4, offset = 0x4, fixed_abs, tag = 'smem constant byte address 0x4 - core index']
  #allocation1 [shape = 'u32[72,128]{1,0:T(1,128)}', space=vmem, size = 0x9000, scoped, tag = 'internal scratch']
  #allocation2 [shape = 'f32[16,128]{1,0:T(8,128)}', space=vmem, size = 0x2000, scoped, tag = 'scratch operand']
  %s0 = inlined_call_operand.hbm [shape: f32[16,128], index: 0, kind: input, shape index: {}]
  %s1 = inlined_call_operand.hbm [shape: f32[128,512], index: 1, kind: input, shape index: {}]
  %s2 = inlined_call_operand.vmem [shape: f32[1,512], index: 2, kind: input, shape index: {}]
  %s3 = inlined_call_operand.hbm [shape: f32[512,128], index: 3, kind: input, shape index: {}]
  %s4 = inlined_call_operand.vmem [shape: f32[1,128], index: 4, kind: input, shape index: {}]
  %s5 = inlined_call_operand.vmem [shape: f32[1,128], index: 5, kind: input, shape index: {}]
  %s6 = inlined_call_operand.vmem [shape: f32[1,128], index: 6, kind: input, shape index: {}]
  %s7 = inlined_call_operand.hbm [shape: f32[16,128], index: 7, kind: output, shape index: {}]
  %s8 = sld [smem:[#allocation0]]
  $region58: #{position_wise_ffn.1} parent=0
    _
  %s10 = ssub.s32 1, %s8
  %s11 = scalar_select 0, %s10, %s8
  $region1: #{position_wise_ffn.1} parent=0
    #allocation3 [shape = 'u8[8192]{0}', space=vmem, size = 0x2000, scoped, tag = 'input window, operand 0, single buffered']
    #allocation4 [shape = 's32[1]{0}', space=sflag, size = 0x4, scoped, tag = 'scoped memory for position_wise_ffn.1']
    #allocation5 [shape = 's32[1]{0}', space=sflag, size = 0x4, scoped, tag = 'scoped memory for position_wise_ffn.1']
    #allocation6 [shape = 'u8[262144]{0}', space=vmem, size = 0x40000, scoped, tag = 'input window, operand 1, single buffered']
    #allocation7 [shape = 's32[1]{0}', space=sflag, size = 0x4, scoped, tag = 'scoped memory for position_wise_ffn.1']
    #allocation8 [shape = 'u8[262144]{0}', space=vmem, size = 0x40000, scoped, tag = 'input window, operand 3, single buffered']
    #allocation9 [shape = 'u8[8192]{0}', space=vmem, size = 0x2000, scoped, tag = 'output window, operand 0, single buffered']
    %12 = vsyncpa [#allocation4], 0
    %13 = vsyncpa [#allocation7], 0
    %14 = vsyncpa [#allocation5], 0
    // Predicated region
    $region2: #{position_wise_ffn.1} parent=1 // pred_check
      _
    $region3: #{position_wise_ffn.1} parent=1 // pred_check_branch
      %16 = sbr.rel (0) target = $region5
    $region4: #{position_wise_ffn.1} parent=1 // pred_region
      %18 = vsyncadd [#allocation4], 0
      %s19 = sshll.u32 %s0, 4
      %s20 = int_to_ptr.hbm [resolvable:$true] %s19
      %s21 = sshll.u32 [#allocation3], 4
      %s22 = int_to_ptr.vmem [resolvable:$true] %s21
      %27 = dma.hbm_to_vmem [thread:$0]  %s20, 256, %s22, [#allocation4], 128, 128, 8
    $region5: #{position_wise_ffn.1} parent=1 // pred_fallthru
      _
    // Predicated region
    $region6: #{position_wise_ffn.1} parent=1 // pred_check
      _
    $region7: #{position_wise_ffn.1} parent=1 // pred_check_branch
      %29 = sbr.rel (0) target = $region9
    $region8: #{position_wise_ffn.1} parent=1 // pred_region
      %31 = vsyncadd [#allocation7], 0
      %s32 = sshll.u32 %s1, 4
      %s33 = int_to_ptr.hbm [resolvable:$true] %s32
      %s34 = sshll.u32 [#allocation6], 4
      %s35 = int_to_ptr.vmem [resolvable:$true] %s34
      %40 = dma.hbm_to_vmem [thread:$0]  %s33, 8192, %s35, [#allocation7], 512, 512, 32
    $region9: #{position_wise_ffn.1} parent=1 // pred_fallthru
      _
    // Predicated region
    $region10: #{position_wise_ffn.1} parent=1 // pred_check
      _
    $region11: #{position_wise_ffn.1} parent=1 // pred_check_branch
      %42 = sbr.rel (0) target = $region13
    $region12: #{position_wise_ffn.1} parent=1 // pred_region
      _
    $region13: #{position_wise_ffn.1} parent=1 // pred_fallthru
      _
    // Predicated region
    $region14: #{position_wise_ffn.1} parent=1 // pred_check
      _
    $region15: #{position_wise_ffn.1} parent=1 // pred_check_branch
      %44 = sbr.rel (0) target = $region17
    $region16: #{position_wise_ffn.1} parent=1 // pred_region
      %46 = vsyncadd [#allocation7], 0
      %s47 = sshll.u32 %s3, 4
      %s48 = int_to_ptr.hbm [resolvable:$true] %s47
      %s49 = sshll.u32 [#allocation8], 4
      %s50 = int_to_ptr.vmem [resolvable:$true] %s49
      %55 = dma.hbm_to_vmem [thread:$0]  %s48, 8192, %s50, [#allocation7], 128, 128, 8
    $region17: #{position_wise_ffn.1} parent=1 // pred_fallthru
      _
    // Predicated region
    $region18: #{position_wise_ffn.1} parent=1 // pred_check
      _
    $region19: #{position_wise_ffn.1} parent=1 // pred_check_branch
      %57 = sbr.rel (0) target = $region21
    $region20: #{position_wise_ffn.1} parent=1 // pred_region
      _
    $region21: #{position_wise_ffn.1} parent=1 // pred_fallthru
      _
    // Predicated region
    $region22: #{position_wise_ffn.1} parent=1 // pred_check
      _
    $region23: #{position_wise_ffn.1} parent=1 // pred_check_branch
      %59 = sbr.rel (0) target = $region25
    $region24: #{position_wise_ffn.1} parent=1 // pred_region
      _
    $region25: #{position_wise_ffn.1} parent=1 // pred_fallthru
      _
    // Predicated region
    $region26: #{position_wise_ffn.1} parent=1 // pred_check
      _
    $region27: #{position_wise_ffn.1} parent=1 // pred_check_branch
      %61 = sbr.rel (0) target = $region29
    $region28: #{position_wise_ffn.1} parent=1 // pred_region
      _
    $region29: #{position_wise_ffn.1} parent=1 // pred_fallthru
      _
    // Predicated region
    $region30: #{position_wise_ffn.1} parent=1 // pred_check
      _
    $region31: #{position_wise_ffn.1} parent=1 // pred_check_branch
      %63 = sbr.rel (0) target = $region33
    $region32: #{position_wise_ffn.1} parent=1 // pred_region
      %65 = dma.done [#allocation4], 256
    $region33: #{position_wise_ffn.1} parent=1 // pred_fallthru
      _
    // Predicated region
    $region34: #{position_wise_ffn.1} parent=1 // pred_check
      _
    $region35: #{position_wise_ffn.1} parent=1 // pred_check_branch
      %67 = sbr.rel (0) target = $region37
    $region36: #{position_wise_ffn.1} parent=1 // pred_region
      %69 = dma.done [#allocation7], 8192
    $region37: #{position_wise_ffn.1} parent=1 // pred_fallthru
      _
    // Predicated region
    $region38: #{position_wise_ffn.1} parent=1 // pred_check
      _
    $region39: #{position_wise_ffn.1} parent=1 // pred_check_branch
      %71 = sbr.rel (0) target = $region41
    $region40: #{position_wise_ffn.1} parent=1 // pred_region
      %73 = dma.done [#allocation7], 8192
    $region41: #{position_wise_ffn.1} parent=1 // pred_fallthru
      _
    %p74 = scmp.eq.s32.totalorder 0, 0
    // Predicated region
    $region42: #{position_wise_ffn.1} parent=1 // pred_check
      %p75 = pneg %p74
    $region43: #{position_wise_ffn.1} parent=1 // pred_check_branch
      %77 = sbr.rel (%p75) target = $region45
    $region44: #{position_wise_ffn.1} parent=1 // pred_region
      %78 = vst [vmem:[#allocation2] sm:$0xff] 0.0
      %79 = vst [vmem:[#allocation2 + $0x8] sm:$0xff] 0.0
    $region45: #{position_wise_ffn.1} parent=1 // pred_fallthru
      _
    %v80 = vld [vmem:[#allocation3] sm:$0xff]
    %v81 = vld [vmem:[#allocation3 + $0x8] sm:$0xff]
    %v82 = vld [vmem:[#allocation6] sm:$0xff]
    %v83 = vld [vmem:[#allocation6 + $0x8] sm:$0xff]
    %v84 = vld [vmem:[#allocation6 + $0x10] sm:$0xff]
    %v85 = vld [vmem:[#allocation6 + $0x18] sm:$0xff]
    %v86 = vld [vmem:[#allocation6 + $0x20] sm:$0xff]
    %v87 = vld [vmem:[#allocation6 + $0x28] sm:$0xff]
    %v88 = vld [vmem:[#allocation6 + $0x30] sm:$0xff]
    %v89 = vld [vmem:[#allocation6 + $0x38] sm:$0xff]
    %v90 = vld [vmem:[#allocation6 + $0x40] sm:$0xff]
    %v91 = vld [vmem:[#allocation6 + $0x48] sm:$0xff]
    %v92 = vld [vmem:[#allocation6 + $0x50] sm:$0xff]
    %v93 = vld [vmem:[#allocation6 + $0x58] sm:$0xff]
    %v94 = vld [vmem:[#allocation6 + $0x60] sm:$0xff]
    %v95 = vld [vmem:[#allocation6 + $0x68] sm:$0xff]
    %v96 = vld [vmem:[#allocation6 + $0x70] sm:$0xff]
    %v97 = vld [vmem:[#allocation6 + $0x78] sm:$0xff]
    %v98 = vld [vmem:[#allocation6 + $0x80] sm:$0xff]
    %v99 = vld [vmem:[#allocation6 + $0x88] sm:$0xff]
    %v100 = vld [vmem:[#allocation6 + $0x90] sm:$0xff]
    %v101 = vld [vmem:[#allocation6 + $0x98] sm:$0xff]
    %v102 = vld [vmem:[#allocation6 + $0xa0] sm:$0xff]
    %v103 = vld [vmem:[#allocation6 + $0xa8] sm:$0xff]
    %v104 = vld [vmem:[#allocation6 + $0xb0] sm:$0xff]
    %v105 = vld [vmem:[#allocation6 + $0xb8] sm:$0xff]
    %v106 = vld [vmem:[#allocation6 + $0xc0] sm:$0xff]
    %v107 = vld [vmem:[#allocation6 + $0xc8] sm:$0xff]
    %v108 = vld [vmem:[#allocation6 + $0xd0] sm:$0xff]
    %v109 = vld [vmem:[#allocation6 + $0xd8] sm:$0xff]
    %v110 = vld [vmem:[#allocation6 + $0xe0] sm:$0xff]
    %v111 = vld [vmem:[#allocation6 + $0xe8] sm:$0xff]
    %v112 = vld [vmem:[#allocation6 + $0xf0] sm:$0xff]
    %v113 = vld [vmem:[#allocation6 + $0xf8] sm:$0xff]
    %v114 = vld [vmem:[#allocation6 + $0x100] sm:$0xff]
    %v115 = vld [vmem:[#allocation6 + $0x108] sm:$0xff]
    %v116 = vld [vmem:[#allocation6 + $0x110] sm:$0xff]
    %v117 = vld [vmem:[#allocation6 + $0x118] sm:$0xff]
    %v118 = vld [vmem:[#allocation6 + $0x120] sm:$0xff]
    %v119 = vld [vmem:[#allocation6 + $0x128] sm:$0xff]
    %v120 = vld [vmem:[#allocation6 + $0x130] sm:$0xff]
    %v121 = vld [vmem:[#allocation6 + $0x138] sm:$0xff]
    %v122 = vld [vmem:[#allocation6 + $0x140] sm:$0xff]
    %v123 = vld [vmem:[#allocation6 + $0x148] sm:$0xff]
    %v124 = vld [vmem:[#allocation6 + $0x150] sm:$0xff]
    %v125 = vld [vmem:[#allocation6 + $0x158] sm:$0xff]
    %v126 = vld [vmem:[#allocation6 + $0x160] sm:$0xff]
    %v127 = vld [vmem:[#allocation6 + $0x168] sm:$0xff]
    %v128 = vld [vmem:[#allocation6 + $0x170] sm:$0xff]
    %v129 = vld [vmem:[#allocation6 + $0x178] sm:$0xff]
    %v130 = vld [vmem:[#allocation6 + $0x180] sm:$0xff]
    %v131 = vld [vmem:[#allocation6 + $0x188] sm:$0xff]
    %v132 = vld [vmem:[#allocation6 + $0x190] sm:$0xff]
    %v133 = vld [vmem:[#allocation6 + $0x198] sm:$0xff]
    %v134 = vld [vmem:[#allocation6 + $0x1a0] sm:$0xff]
    %v135 = vld [vmem:[#allocation6 + $0x1a8] sm:$0xff]
    %v136 = vld [vmem:[#allocation6 + $0x1b0] sm:$0xff]
    %v137 = vld [vmem:[#allocation6 + $0x1b8] sm:$0xff]
    %v138 = vld [vmem:[#allocation6 + $0x1c0] sm:$0xff]
    %v139 = vld [vmem:[#allocation6 + $0x1c8] sm:$0xff]
    %v140 = vld [vmem:[#allocation6 + $0x1d0] sm:$0xff]
    %v141 = vld [vmem:[#allocation6 + $0x1d8] sm:$0xff]
    %v142 = vld [vmem:[#allocation6 + $0x1e0] sm:$0xff]
    %v143 = vld [vmem:[#allocation6 + $0x1e8] sm:$0xff]
    %v144 = vld [vmem:[#allocation6 + $0x1f0] sm:$0xff]
    %v145 = vld [vmem:[#allocation6 + $0x1f8] sm:$0xff]
    %v146 = vld [vmem:[%s2] sm:$0xf]
    %v148 = vperm.slane %v146, 0
    %v149 = vperm.slane %v146, 1
    %v150 = vperm.slane %v146, 2
    %v151 = vperm.slane %v146, 3
    %156 = vmatpush.msra.mxu0 %v142
    %157 = vmatpush.msra.mxu0 %v138
    %158 = vmatpush.msra.mxu0 %v134
    %159 = vmatpush.msra.mxu0 %v130
    %160 = vmatpush.msra.mxu0 %v126
    %161 = vmatpush.msra.mxu0 %v122
    %162 = vmatpush.msra.mxu0 %v118
    %163 = vmatpush.msra.mxu0 %v114
    %164 = vmatpush.msra.mxu0 %v110
    %165 = vmatpush.msra.mxu0 %v106
    %166 = vmatpush.msra.mxu0 %v102
    %167 = vmatpush.msra.mxu0 %v98
    %168 = vmatpush.msra.mxu0 %v94
    %169 = vmatpush.msra.mxu0 %v90
    %170 = vmatpush.msra.mxu0 %v86
    %171 = vmatpush.msra.mxu0 %v82
    %172 = vmatmul.f32.gmra.mxu0 %v80
    %v173 = vpop.f32.mrf.mxu0
    %v174 = vadd.f32 %v148, %v173
    %175 = vmatmul.f32.gmra.mxu0 %v81
    %v176 = vpop.f32.mrf.mxu0
    %v177 = vadd.f32 %v148, %v176
    %178 = vdwg.mxu0
    %179 = vmatpush.msra.mxu0 %v143
    %180 = vmatpush.msra.mxu0 %v139
    %181 = vmatpush.msra.mxu0 %v135
    %182 = vmatpush.msra.mxu0 %v131
    %183 = vmatpush.msra.mxu0 %v127
    %184 = vmatpush.msra.mxu0 %v123
    %185 = vmatpush.msra.mxu0 %v119
    %186 = vmatpush.msra.mxu0 %v115
    %187 = vmatpush.msra.mxu0 %v111
    %188 = vmatpush.msra.mxu0 %v107
    %189 = vmatpush.msra.mxu0 %v103
    %190 = vmatpush.msra.mxu0 %v99
    %191 = vmatpush.msra.mxu0 %v95
    %192 = vmatpush.msra.mxu0 %v91
    %193 = vmatpush.msra.mxu0 %v87
    %194 = vmatpush.msra.mxu0 %v83
    %195 = vmatmul.f32.gmra.mxu0 %v80
    %v196 = vpop.f32.mrf.mxu0
    %v197 = vadd.f32 %v149, %v196
    %198 = vmatmul.f32.gmra.mxu0 %v81
    %v199 = vpop.f32.mrf.mxu0
    %v200 = vadd.f32 %v149, %v199
    %201 = vdwg.mxu0
    %202 = vmatpush.msra.mxu0 %v144
    %203 = vmatpush.msra.mxu0 %v140
    %204 = vmatpush.msra.mxu0 %v136
    %205 = vmatpush.msra.mxu0 %v132
    %206 = vmatpush.msra.mxu0 %v128
    %207 = vmatpush.msra.mxu0 %v124
    %208 = vmatpush.msra.mxu0 %v120
    %209 = vmatpush.msra.mxu0 %v116
    %210 = vmatpush.msra.mxu0 %v112
    %211 = vmatpush.msra.mxu0 %v108
    %212 = vmatpush.msra.mxu0 %v104
    %213 = vmatpush.msra.mxu0 %v100
    %214 = vmatpush.msra.mxu0 %v96
    %215 = vmatpush.msra.mxu0 %v92
    %216 = vmatpush.msra.mxu0 %v88
    %217 = vmatpush.msra.mxu0 %v84
    %218 = vmatmul.f32.gmra.mxu0 %v80
    %v219 = vpop.f32.mrf.mxu0
    %v220 = vadd.f32 %v150, %v219
    %221 = vmatmul.f32.gmra.mxu0 %v81
    %v222 = vpop.f32.mrf.mxu0
    %v223 = vadd.f32 %v150, %v222
    %224 = vdwg.mxu0
    %225 = vmatpush.msra.mxu0 %v145
    %226 = vmatpush.msra.mxu0 %v141
    %227 = vmatpush.msra.mxu0 %v137
    %228 = vmatpush.msra.mxu0 %v133
    %229 = vmatpush.msra.mxu0 %v129
    %230 = vmatpush.msra.mxu0 %v125
    %231 = vmatpush.msra.mxu0 %v121
    %232 = vmatpush.msra.mxu0 %v117
    %233 = vmatpush.msra.mxu0 %v113
    %234 = vmatpush.msra.mxu0 %v109
    %235 = vmatpush.msra.mxu0 %v105
    %236 = vmatpush.msra.mxu0 %v101
    %237 = vmatpush.msra.mxu0 %v97
    %238 = vmatpush.msra.mxu0 %v93
    %239 = vmatpush.msra.mxu0 %v89
    %240 = vmatpush.msra.mxu0 %v85
    %241 = vmatmul.f32.gmra.mxu0 %v80
    %v242 = vpop.f32.mrf.mxu0
    %v243 = vadd.f32 %v151, %v242
    %244 = vmatmul.f32.gmra.mxu0 %v81
    %v245 = vpop.f32.mrf.mxu0
    %v246 = vadd.f32 %v151, %v245
    %247 = vdwg.mxu0
    %v248 = vmax.f32 %v174, 0.0
    %v249 = vmax.f32 %v197, 0.0
    %v250 = vmax.f32 %v220, 0.0
    %v251 = vmax.f32 %v243, 0.0
    %v252 = vmax.f32 %v177, 0.0
    %v253 = vmax.f32 %v200, 0.0
    %v254 = vmax.f32 %v223, 0.0
    %v255 = vmax.f32 %v246, 0.0
    %v256 = vld [vmem:[#allocation2] sm:$0xff]
    %v257 = vld [vmem:[#allocation2 + $0x8] sm:$0xff]
    %v258 = vld [vmem:[#allocation8] sm:$0xff]
    %v259 = vld [vmem:[#allocation8 + $0x8] sm:$0xff]
    %v260 = vld [vmem:[#allocation8 + $0x10] sm:$0xff]
    %v261 = vld [vmem:[#allocation8 + $0x18] sm:$0xff]
    %v262 = vld [vmem:[#allocation8 + $0x20] sm:$0xff]
    %v263 = vld [vmem:[#allocation8 + $0x28] sm:$0xff]
    %v264 = vld [vmem:[#allocation8 + $0x30] sm:$0xff]
    %v265 = vld [vmem:[#allocation8 + $0x38] sm:$0xff]
    %v266 = vld [vmem:[#allocation8 + $0x40] sm:$0xff]
    %v267 = vld [vmem:[#allocation8 + $0x48] sm:$0xff]
    %v268 = vld [vmem:[#allocation8 + $0x50] sm:$0xff]
    %v269 = vld [vmem:[#allocation8 + $0x58] sm:$0xff]
    %v270 = vld [vmem:[#allocation8 + $0x60] sm:$0xff]
    %v271 = vld [vmem:[#allocation8 + $0x68] sm:$0xff]
    %v272 = vld [vmem:[#allocation8 + $0x70] sm:$0xff]
    %v273 = vld [vmem:[#allocation8 + $0x78] sm:$0xff]
    %v274 = vld [vmem:[#allocation8 + $0x80] sm:$0xff]
    %v275 = vld [vmem:[#allocation8 + $0x88] sm:$0xff]
    %v276 = vld [vmem:[#allocation8 + $0x90] sm:$0xff]
    %v277 = vld [vmem:[#allocation8 + $0x98] sm:$0xff]
    %v278 = vld [vmem:[#allocation8 + $0xa0] sm:$0xff]
    %v279 = vld [vmem:[#allocation8 + $0xa8] sm:$0xff]
    %v280 = vld [vmem:[#allocation8 + $0xb0] sm:$0xff]
    %v281 = vld [vmem:[#allocation8 + $0xb8] sm:$0xff]
    %v282 = vld [vmem:[#allocation8 + $0xc0] sm:$0xff]
    %v283 = vld [vmem:[#allocation8 + $0xc8] sm:$0xff]
    %v284 = vld [vmem:[#allocation8 + $0xd0] sm:$0xff]
    %v285 = vld [vmem:[#allocation8 + $0xd8] sm:$0xff]
    %v286 = vld [vmem:[#allocation8 + $0xe0] sm:$0xff]
    %v287 = vld [vmem:[#allocation8 + $0xe8] sm:$0xff]
    %v288 = vld [vmem:[#allocation8 + $0xf0] sm:$0xff]
    %v289 = vld [vmem:[#allocation8 + $0xf8] sm:$0xff]
    %v290 = vld [vmem:[#allocation8 + $0x100] sm:$0xff]
    %v291 = vld [vmem:[#allocation8 + $0x108] sm:$0xff]
    %v292 = vld [vmem:[#allocation8 + $0x110] sm:$0xff]
    %v293 = vld [vmem:[#allocation8 + $0x118] sm:$0xff]
    %v294 = vld [vmem:[#allocation8 + $0x120] sm:$0xff]
    %v295 = vld [vmem:[#allocation8 + $0x128] sm:$0xff]
    %v296 = vld [vmem:[#allocation8 + $0x130] sm:$0xff]
    %v297 = vld [vmem:[#allocation8 + $0x138] sm:$0xff]
    %v298 = vld [vmem:[#allocation8 + $0x140] sm:$0xff]
    %v299 = vld [vmem:[#allocation8 + $0x148] sm:$0xff]
    %v300 = vld [vmem:[#allocation8 + $0x150] sm:$0xff]
    %v301 = vld [vmem:[#allocation8 + $0x158] sm:$0xff]
    %v302 = vld [vmem:[#allocation8 + $0x160] sm:$0xff]
    %v303 = vld [vmem:[#allocation8 + $0x168] sm:$0xff]
    %v304 = vld [vmem:[#allocation8 + $0x170] sm:$0xff]
    %v305 = vld [vmem:[#allocation8 + $0x178] sm:$0xff]
    %v306 = vld [vmem:[#allocation8 + $0x180] sm:$0xff]
    %v307 = vld [vmem:[#allocation8 + $0x188] sm:$0xff]
    %v308 = vld [vmem:[#allocation8 + $0x190] sm:$0xff]
    %v309 = vld [vmem:[#allocation8 + $0x198] sm:$0xff]
    %v310 = vld [vmem:[#allocation8 + $0x1a0] sm:$0xff]
    %v311 = vld [vmem:[#allocation8 + $0x1a8] sm:$0xff]
    %v312 = vld [vmem:[#allocation8 + $0x1b0] sm:$0xff]
    %v313 = vld [vmem:[#allocation8 + $0x1b8] sm:$0xff]
    %v314 = vld [vmem:[#allocation8 + $0x1c0] sm:$0xff]
    %v315 = vld [vmem:[#allocation8 + $0x1c8] sm:$0xff]
    %v316 = vld [vmem:[#allocation8 + $0x1d0] sm:$0xff]
    %v317 = vld [vmem:[#allocation8 + $0x1d8] sm:$0xff]
    %v318 = vld [vmem:[#allocation8 + $0x1e0] sm:$0xff]
    %v319 = vld [vmem:[#allocation8 + $0x1e8] sm:$0xff]
    %v320 = vld [vmem:[#allocation8 + $0x1f0] sm:$0xff]
    %v321 = vld [vmem:[#allocation8 + $0x1f8] sm:$0xff]
    %322 = vmatpush.msra.mxu0 %v273
    %323 = vmatpush.msra.mxu0 %v272
    %324 = vmatpush.msra.mxu0 %v271
    %325 = vmatpush.msra.mxu0 %v270
    %326 = vmatpush.msra.mxu0 %v269
    %327 = vmatpush.msra.mxu0 %v268
    %328 = vmatpush.msra.mxu0 %v267
    %329 = vmatpush.msra.mxu0 %v266
    %330 = vmatpush.msra.mxu0 %v265
    %331 = vmatpush.msra.mxu0 %v264
    %332 = vmatpush.msra.mxu0 %v263
    %333 = vmatpush.msra.mxu0 %v262
    %334 = vmatpush.msra.mxu0 %v261
    %335 = vmatpush.msra.mxu0 %v260
    %336 = vmatpush.msra.mxu0 %v259
    %337 = vmatpush.msra.mxu0 %v258
    %338 = vmatmul.f32.gmra.mxu0 %v248
    %v339 = vpop.f32.mrf.mxu0
    %v340 = vadd.f32 0.0, %v339
    %341 = vmatmul.f32.gmra.mxu0 %v252
    %v342 = vpop.f32.mrf.mxu0
    %v343 = vadd.f32 0.0, %v342
    %344 = vdwg.mxu0
    %345 = vmatpush.msra.mxu0 %v289
    %346 = vmatpush.msra.mxu0 %v288
    %347 = vmatpush.msra.mxu0 %v287
    %348 = vmatpush.msra.mxu0 %v286
    %349 = vmatpush.msra.mxu0 %v285
    %350 = vmatpush.msra.mxu0 %v284
    %351 = vmatpush.msra.mxu0 %v283
    %352 = vmatpush.msra.mxu0 %v282
    %353 = vmatpush.msra.mxu0 %v281
    %354 = vmatpush.msra.mxu0 %v280
    %355 = vmatpush.msra.mxu0 %v279
    %356 = vmatpush.msra.mxu0 %v278
    %357 = vmatpush.msra.mxu0 %v277
    %358 = vmatpush.msra.mxu0 %v276
    %359 = vmatpush.msra.mxu0 %v275
    %360 = vmatpush.msra.mxu0 %v274
    %361 = vmatmul.f32.gmra.mxu0 %v249
    %v362 = vpop.f32.mrf.mxu0
    %v363 = vadd.f32 %v340, %v362
    %364 = vmatmul.f32.gmra.mxu0 %v253
    %v365 = vpop.f32.mrf.mxu0
    %v366 = vadd.f32 %v343, %v365
    %367 = vdwg.mxu0
    %368 = vmatpush.msra.mxu0 %v305
    %369 = vmatpush.msra.mxu0 %v304
    %370 = vmatpush.msra.mxu0 %v303
    %371 = vmatpush.msra.mxu0 %v302
    %372 = vmatpush.msra.mxu0 %v301
    %373 = vmatpush.msra.mxu0 %v300
    %374 = vmatpush.msra.mxu0 %v299
    %375 = vmatpush.msra.mxu0 %v298
    %376 = vmatpush.msra.mxu0 %v297
    %377 = vmatpush.msra.mxu0 %v296
    %378 = vmatpush.msra.mxu0 %v295
    %379 = vmatpush.msra.mxu0 %v294
    %380 = vmatpush.msra.mxu0 %v293
    %381 = vmatpush.msra.mxu0 %v292
    %382 = vmatpush.msra.mxu0 %v291
    %383 = vmatpush.msra.mxu0 %v290
    %384 = vmatmul.f32.gmra.mxu0 %v250
    %v385 = vpop.f32.mrf.mxu0
    %v386 = vadd.f32 %v363, %v385
    %387 = vmatmul.f32.gmra.mxu0 %v254
    %v388 = vpop.f32.mrf.mxu0
    %v389 = vadd.f32 %v366, %v388
    %390 = vdwg.mxu0
    %391 = vmatpush.msra.mxu0 %v321
    %392 = vmatpush.msra.mxu0 %v320
    %393 = vmatpush.msra.mxu0 %v319
    %394 = vmatpush.msra.mxu0 %v318
    %395 = vmatpush.msra.mxu0 %v317
    %396 = vmatpush.msra.mxu0 %v316
    %397 = vmatpush.msra.mxu0 %v315
    %398 = vmatpush.msra.mxu0 %v314
    %399 = vmatpush.msra.mxu0 %v313
    %400 = vmatpush.msra.mxu0 %v312
    %401 = vmatpush.msra.mxu0 %v311
    %402 = vmatpush.msra.mxu0 %v310
    %403 = vmatpush.msra.mxu0 %v309
    %404 = vmatpush.msra.mxu0 %v308
    %405 = vmatpush.msra.mxu0 %v307
    %406 = vmatpush.msra.mxu0 %v306
    %407 = vmatmul.f32.gmra.mxu0 %v251
    %v408 = vpop.f32.mrf.mxu0
    %v409 = vadd.f32 %v386, %v408
    %410 = vmatmul.f32.gmra.mxu0 %v255
    %v411 = vpop.f32.mrf.mxu0
    %v412 = vadd.f32 %v389, %v411
    %413 = vdwg.mxu0
    %v414 = vadd.f32 %v256, %v409
    %v415 = vadd.f32 %v257, %v412
    %416 = vst [vmem:[#allocation2] sm:$0xff] %v414
    %417 = vst [vmem:[#allocation2 + $0x8] sm:$0xff] %v415
    // Predicated region
    $region46: #{position_wise_ffn.1} parent=1 // pred_check
      %p418 = pneg %p74
    $region47: #{position_wise_ffn.1} parent=1 // pred_check_branch
      %420 = sbr.rel (%p418) target = $region49
    $region48: #{position_wise_ffn.1} parent=1 // pred_region
      %v421 = vld [vmem:[#allocation2] sm:$0xff]
      %v422 = vld [vmem:[#allocation2 + $0x8] sm:$0xff]
      %v423 = vld [vmem:[%s4] sm:$0x1]
      %v425 = vperm.slane %v423, 0
      %v427 = vadd.f32 %v421, %v425
      %v428 = vadd.f32 %v422, %v425
      %v429 = vld [vmem:[#allocation3] sm:$0xff]
      %v430 = vld [vmem:[#allocation3 + $0x8] sm:$0xff]
      %v431 = vadd.f32 %v427, %v429
      %v432 = vadd.f32 %v428, %v430
      %433 = vadd.xlane.f32.xlu0 %v431
      %v434 = vpop.xlane.xlu0 %433
      %435 = vadd.xlane.f32.xlu0 %v432
      %v436 = vpop.xlane.xlu0 %435
      %v437 = vrcp.pop 128.0
      %v438 = vmul.f32 128.0, %v437
      %v439 = vsub.f32 1.0, %v438
      %v440 = vmul.f32 %v437, %v439
      %v441 = vadd.f32 %v437, %v440
      %vm442 = vweird.f32 %v437
      %v443 = vsel %vm442, %v437, %v441
      %v444 = vmul.f32 %v434, %v443
      %v445 = vmul.f32 %v436, %v443
      %v446 = vsub.f32 %v431, %v444
      %v447 = vsub.f32 %v432, %v445
      %v448 = vmul.f32 %v446, %v446
      %v449 = vmul.f32 %v447, %v447
      %450 = vadd.xlane.f32.xlu0 %v448
      %v451 = vpop.xlane.xlu0 %450
      %452 = vadd.xlane.f32.xlu0 %v449
      %v453 = vpop.xlane.xlu0 %452
      %v454 = vmul.f32 %v451, %v443
      %v455 = vmul.f32 %v453, %v443
      %v456 = vadd.f32 %v454, 1e-05
      %v457 = vadd.f32 %v455, 1e-05
      %v458 = vrsqrt.pop %v456
      %v459 = vmul.f32 %v458, %v456
      %v460 = vmul.f32 %v459, %v458
      %v461 = vmul.f32 0.5, %v460
      %v462 = vsub.f32 1.5, %v461
      %v463 = vmul.f32 %v458, %v462
      %vm464 = vweird.f32 %v456
      %vm465 = vweird.f32 %v458
      %vm466 = vmor %vm464, %vm465
      %v467 = vsel %vm466, %v458, %v463
      %v468 = vrsqrt.pop %v457
      %v469 = vmul.f32 %v468, %v457
      %v470 = vmul.f32 %v469, %v468
      %v471 = vmul.f32 0.5, %v470
      %v472 = vsub.f32 1.5, %v471
      %v473 = vmul.f32 %v468, %v472
      %vm474 = vweird.f32 %v457
      %vm475 = vweird.f32 %v468
      %vm476 = vmor %vm474, %vm475
      %v477 = vsel %vm476, %v468, %v473
      %v478 = vmul.f32 %v446, %v467
      %v479 = vmul.f32 %v447, %v477
      %v480 = vld [vmem:[%s5] sm:$0x1]
      %v482 = vperm.slane %v480, 0
      %v484 = vmul.f32 %v478, %v482
      %v485 = vmul.f32 %v479, %v482
      %v486 = vld [vmem:[%s6] sm:$0x1]
      %v488 = vperm.slane %v486, 0
      %v490 = vadd.f32 %v484, %v488
      %v491 = vadd.f32 %v485, %v488
      %492 = vst [vmem:[#allocation9] sm:$0xff] %v490
      %493 = vst [vmem:[#allocation9 + $0x8] sm:$0xff] %v491
    $region49: #{position_wise_ffn.1} parent=1 // pred_fallthru
      _
    // Predicated region
    $region50: #{position_wise_ffn.1} parent=1 // pred_check
      _
    $region51: #{position_wise_ffn.1} parent=1 // pred_check_branch
      %495 = sbr.rel (0) target = $region53
    $region52: #{position_wise_ffn.1} parent=1 // pred_region
      %497 = vsyncadd [#allocation5], 0
      %s498 = sshll.u32 [#allocation9], 4
      %s499 = int_to_ptr.vmem [resolvable:$true] %s498
      %s500 = sshll.u32 %s7, 4
      %s501 = int_to_ptr.hbm [resolvable:$true] %s500
      %506 = dma.vmem_to_hbm [thread:$0]  %s499, 256, %s501, [#allocation5], 128, 128, 8
    $region53: #{position_wise_ffn.1} parent=1 // pred_fallthru
      _
    // Predicated region
    $region54: #{position_wise_ffn.1} parent=1 // pred_check
      _
    $region55: #{position_wise_ffn.1} parent=1 // pred_check_branch
      %508 = sbr.rel (0) target = $region57
    $region56: #{position_wise_ffn.1} parent=1 // pred_region
      %510 = dma.done [#allocation5], 256
    $region57: #{position_wise_ffn.1} parent=1 // pred_fallthru
      _
    %511 = vsyncpa [#allocation4], 1
    %512 = vsyncpa [#allocation7], 1
    %513 = vsyncpa [#allocation5], 1

</llo_original>
